<compile_context>
chip_gen: v5e
topology: v5e:2x2
jax: 0.10.0
libtpu: 0.0.40
codegen_flags: <defaults>
</compile_context>

<pallas_src>
import functools
import math

import jax
import jax.numpy as jnp
from jax import lax
from jax.experimental import pallas as pl
from jax.experimental.pallas import tpu as pltpu

_MiB = 1024 * 1024


# ----------------------------------------------------------------------------
# Kernels
# ----------------------------------------------------------------------------
def kv_projection_kernel(h_ref, wk_ref, bk_ref, wv_ref, bv_ref, k_ref, v_ref, *,
                         mxu_dtype):
    """K = H @ Wk^T + bk ; V = H @ Wv^T + bv   (one batch element per grid step)."""
    h = h_ref[0].astype(mxu_dtype)                                  # (Lk, H)
    k = jnp.dot(h, wk_ref[...], preferred_element_type=jnp.float32) + bk_ref[...]
    v = jnp.dot(h, wv_ref[...], preferred_element_type=jnp.float32) + bv_ref[...]
    k_ref[0] = k.astype(k_ref.dtype)
    v_ref[0] = v.astype(v_ref.dtype)


def attention_kernel(q_ref, k_ref, v_ref, wq_ref, bq_ref, o_ref, *, mxu_dtype):
    """softmax((q @ Wq_scaled^T + bq_scaled) @ K^T) @ V for one (batch, q-tile)."""
    # Query projection (1/sqrt(H) already folded into Wq^T / bq by the wrapper).
    q = q_ref[0].astype(mxu_dtype)                                  # (tq, H)
    q_proj = jnp.dot(q, wq_ref[...], preferred_element_type=jnp.float32)
    q_proj = (q_proj + bq_ref[...]).astype(mxu_dtype)               # (tq, H)

    # scores = Q @ K^T without materializing a transpose of K (NT dot_general,
    # contracting the last dims — lowers cleanly, same as stock flash kernels).
    scores = lax.dot_general(
        q_proj, k_ref[0],
        dimension_numbers=(((1,), (1,)), ((), ())),
        preferred_element_type=jnp.float32)                         # (tq, Lk) f32

    # Numerically stable softmax in f32.
    scores = scores - jnp.max(scores, axis=-1, keepdims=True)
    p = jnp.exp(scores)
    denom = jnp.sum(p, axis=-1, keepdims=True)                      # (tq, 1) f32

    # P @ V in MXU dtype with f32 accumulation; normalize with EUP approx reciprocal.
    out = jnp.dot(p.astype(v_ref.dtype), v_ref[0],
                  preferred_element_type=jnp.float32)               # (tq, H) f32
    out = out * pl.reciprocal(denom, approx=True)
    o_ref[0] = out.astype(o_ref.dtype)


# ----------------------------------------------------------------------------
# Generation-aware budgeting helpers
# ----------------------------------------------------------------------------
def _round_up(x, m):
    return ((x + m - 1) // m) * m


def _vmem_and_max_tile():
    """Return (vmem_limit_bytes | None, max query tile) for the local TPU generation."""
    cap = None
    try:
        cap = int(pltpu.get_tpu_info().vmem_capacity_bytes)
    except Exception:
        cap = None
    kind = ""
    try:
        kind = jax.devices()[0].device_kind.lower()
    except Exception:
        pass

    if cap is not None and cap > 0:
        # ~82% of physical VMEM, always leaving >= 8 MiB of headroom for the
        # compiler's internal scratch / spill (v7x: ~52 MiB, v5e/v6e: ~105 MiB).
        vmem_limit = max(16 * _MiB, min(int(cap * 0.82), cap - 8 * _MiB))
    else:
        vmem_limit = None  # fall back to the compiler default scoped limit

    small_vmem = cap is not None and cap <= 64 * _MiB               # v7x-class core
    max_tile = 256 if (small_vmem or "v5" in kind) else 512
    return vmem_limit, max_tile


def _select_tile_q(Lq, Lk, max_tile, vmem_budget_bytes):
    """Largest power-of-two tile (<= max_tile) whose f32 scores+p tiles fit the budget."""
    budget = max(vmem_budget_bytes // 4, 2 * _MiB)
    t = max_tile
    while t > 8 and 2 * t * Lk * 4 > budget:
        t //= 2
    t = max(8, min(t, _round_up(Lq, 8)))
    return t


# ----------------------------------------------------------------------------
# Wrapper
# ----------------------------------------------------------------------------
def attention_pallas(query, hidden_states, wq, bq, wk, bk, wv, bv, *,
                     tile_q=None, mxu_bf16=True):
    B, Lq, H = query.shape
    Bh, Lk, H2 = hidden_states.shape
    assert H2 == H and Bh == B

    in_dtype = query.dtype
    # bf16 MXU operands for f32 inputs (full MXU rate, f32 accumulation kept).
    use_bf16 = bool(mxu_bf16) and in_dtype == jnp.float32
    mxu_dtype = jnp.bfloat16 if use_bf16 else in_dtype

    # Pre-transpose the nn.Linear weights once in the wrapper (x @ W^T == x @ Wt)
    # and fold the 1/sqrt(H) softmax scale into the Q projection (free).
    scale = 1.0 / math.sqrt(H)
    wq_t = (jnp.transpose(wq).astype(jnp.float32) * scale).astype(mxu_dtype)
    bq2 = (bq.astype(jnp.float32) * scale).reshape(1, H)
    wk_t = jnp.transpose(wk).astype(mxu_dtype)
    bk2 = bk.astype(jnp.float32).reshape(1, H)
    wv_t = jnp.transpose(wv).astype(mxu_dtype)
    bv2 = bv.astype(jnp.float32).reshape(1, H)

    vmem_limit, max_tile = _vmem_and_max_tile()
    compiler_kwargs = {}
    if vmem_limit is not None:
        compiler_kwargs["vmem_limit_bytes"] = vmem_limit

    if tile_q is None:
        tile_q = _select_tile_q(Lq, Lk, max_tile,
                                vmem_limit if vmem_limit is not None else 32 * _MiB)
    tile_q = max(8, _round_up(tile_q, 8))

    # Pad Lq to a multiple of tile_q (padded rows produce finite garbage, sliced off).
    Lq_pad = _round_up(Lq, tile_q)
    if Lq_pad != Lq:
        q_in = jnp.pad(query, ((0, 0), (0, Lq_pad - Lq), (0, 0)))
    else:
        q_in = query
    nq = Lq_pad // tile_q

    def invariant_weight_spec(nargs):
        maps = {1: (lambda b: (0, 0)), 2: (lambda b, i: (0, 0))}
        return lambda shape: pl.BlockSpec(shape, maps[nargs],
                                          pipeline_mode=pl.Buffered(1))

    # --- Prologue: project K / V once per batch element (both K and V in HBM in
    #     the MXU dtype, halving the attention kernel's K/V DMA for f32 inputs).
    wspec1 = invariant_weight_spec(1)
    k_proj, v_proj = pl.pallas_call(
        functools.partial(kv_projection_kernel, mxu_dtype=mxu_dtype),
        out_shape=(jax.ShapeDtypeStruct((B, Lk, H), mxu_dtype),
                   jax.ShapeDtypeStruct((B, Lk, H), mxu_dtype)),
        grid_spec=pltpu.PrefetchScalarGridSpec(
            num_scalar_prefetch=0,
            grid=(B,),
            in_specs=[
                pl.BlockSpec((1, Lk, H), lambda b: (b, 0, 0)),      # hidden_states
                wspec1((H, H)),                                     # Wk^T
                wspec1((1, H)),                                     # bk
                wspec1((H, H)),                                     # Wv^T
                wspec1((1, H)),                                     # bv
            ],
            out_specs=[
                pl.BlockSpec((1, Lk, H), lambda b: (b, 0, 0)),      # K
                pl.BlockSpec((1, Lk, H), lambda b: (b, 0, 0)),      # V
            ],
        ),
        compiler_params=pltpu.CompilerParams(
            dimension_semantics=("parallel",), **compiler_kwargs),
    )(hidden_states, wk_t, bk2, wv_t, bv2)

    # --- Main attention kernel: no cross-iteration scratch, so both grid axes are
    #     "parallel" (splittable across v7x's two TensorCores even when B == 1).
    wspec2 = invariant_weight_spec(2)
    out = pl.pallas_call(
        functools.partial(attention_kernel, mxu_dtype=mxu_dtype),
        out_shape=jax.ShapeDtypeStruct((B, Lq_pad, H), in_dtype),
        grid_spec=pltpu.PrefetchScalarGridSpec(
            num_scalar_prefetch=0,
            grid=(B, nq),
            in_specs=[
                pl.BlockSpec((1, tile_q, H), lambda b, i: (b, i, 0)),   # query tile
                # K / V only change with the batch index -> single-buffer them
                # (saves a permanent full-Lk buffer; matters on v7x's 64 MiB).
                pl.BlockSpec((1, Lk, H), lambda b, i: (b, 0, 0),
                             pipeline_mode=pl.Buffered(1)),             # K
                pl.BlockSpec((1, Lk, H), lambda b, i: (b, 0, 0),
                             pipeline_mode=pl.Buffered(1)),             # V
                wspec2((H, H)),                                          # Wq^T (scaled)
                wspec2((1, H)),                                          # bq (scaled)
            ],
            out_specs=pl.BlockSpec((1, tile_q, H), lambda b, i: (b, i, 0)),
        ),
        compiler_params=pltpu.CompilerParams(
            dimension_semantics=("parallel", "parallel"), **compiler_kwargs),
    )(q_in, k_proj, v_proj, wq_t, bq2)

    if Lq_pad != Lq:
        out = out[:, :Lq, :]
    return out


# ----------------------------------------------------------------------------
# Pure-JAX reference (matches the PyTorch module exactly, all-f32)
# ----------------------------------------------------------------------------
def attention_ref(query, hidden_states, wq, bq, wk, bk, wv, bv, hidden_size):
    key = jnp.einsum("blh,oh->blo", hidden_states, wk) + bk
    q = jnp.einsum("blh,oh->blo", query, wq) + bq
    value = jnp.einsum("blh,oh->blo", hidden_states, wv) + bv
    scores = jnp.einsum("bqh,bkh->bqk", q, key) / math.sqrt(hidden_size)
    p = jax.nn.softmax(scores, axis=-1)
    return jnp.einsum("bqk,bkh->bqh", p, value)


if __name__ == "__main__":
    B, Lq, Lk, H = 2, 8, 8, 32
    key = jax.random.PRNGKey(0)
    ks = jax.random.split(key, 8)

    query = jax.random.normal(ks[0], (B, Lq, H), dtype=jnp.float32)
    hidden_states = jax.random.normal(ks[1], (B, Lk, H), dtype=jnp.float32)

    # nn.Linear parameter shapes: W = (out_features, in_features), b = (out_features,)
    bound = 1.0 / math.sqrt(H)
    wq = jax.random.uniform(ks[2], (H, H), minval=-bound, maxval=bound, dtype=jnp.float32)
    bq = jax.random.uniform(ks[3], (H,), minval=-bound, maxval=bound, dtype=jnp.float32)
    wk = jax.random.uniform(ks[4], (H, H), minval=-bound, maxval=bound, dtype=jnp.float32)
    bk = jax.random.uniform(ks[5], (H,), minval=-bound, maxval=bound, dtype=jnp.float32)
    wv = jax.random.uniform(ks[6], (H, H), minval=-bound, maxval=bound, dtype=jnp.float32)
    bv = jax.random.uniform(ks[7], (H,), minval=-bound, maxval=bound, dtype=jnp.float32)

    out = attention_pallas(query, hidden_states, wq, bq, wk, bk, wv, bv)
    out = jax.block_until_ready(out)

    ref = attention_ref(query, hidden_states, wq, bq, wk, bk, wv, bv, H)
    assert out.shape == (B, Lq, H)
    # Tolerance accounts for bf16 MXU operands (f32 accumulation) and the EUP
    # approximate reciprocal in the softmax normalization — the standard
    # flash-attention precision tradeoff relative to the all-f32 reference.
    assert jnp.allclose(out, ref, atol=2e-2, rtol=2e-2), (
        f"mismatch vs reference, max abs diff = {jnp.max(jnp.abs(out - ref))}")

    print("KERNEL_OK")
</pallas_src>

<mosaic_0001>
module attributes {stable_mosaic.version = 11 : i64} {
  func.func @kv_projection_kernel(%arg0: i32, %arg1: memref<1x8x32xf32, #tpu.memory_space<vmem>>, %arg2: memref<32x32xbf16, #tpu.memory_space<vmem>>, %arg3: memref<1x32xf32, #tpu.memory_space<vmem>>, %arg4: memref<32x32xbf16, #tpu.memory_space<vmem>>, %arg5: memref<1x32xf32, #tpu.memory_space<vmem>>, %arg6: memref<1x8x32xbf16, #tpu.memory_space<vmem>>, %arg7: memref<1x8x32xbf16, #tpu.memory_space<vmem>>) attributes {dimension_semantics = [#tpu.dimension_semantics<parallel>], iteration_bounds = array<i64: 2>, scalar_prefetch = 0 : i64, scratch_operands = 0 : i64, tpu.core_type = #tpu.core_type<tc>, window_params = [{transform_indices = @transform_0, window_bounds = array<i64: 1, 8, 32>}, {pipeline_mode = #tpu.pipeline_mode<synchronous>, transform_indices = @transform_1, window_bounds = array<i64: 32, 32>}, {pipeline_mode = #tpu.pipeline_mode<synchronous>, transform_indices = @transform_2, window_bounds = array<i64: 1, 32>}, {pipeline_mode = #tpu.pipeline_mode<synchronous>, transform_indices = @transform_3, window_bounds = array<i64: 32, 32>}, {pipeline_mode = #tpu.pipeline_mode<synchronous>, transform_indices = @transform_4, window_bounds = array<i64: 1, 32>}, {transform_indices = @transform_5, window_bounds = array<i64: 1, 8, 32>}, {transform_indices = @transform_6, window_bounds = array<i64: 1, 8, 32>}]} {
    %c0 = arith.constant 0 : index
    %c0_0 = arith.constant 0 : index
    %c0_1 = arith.constant 0 : index
    %0 = vector.load %arg1[%c0, %c0_0, %c0_1] : memref<1x8x32xf32, #tpu.memory_space<vmem>>, vector<1x8x32xf32>
    %1 = vector.shape_cast %0 : vector<1x8x32xf32> to vector<8x32xf32>
    %2 = arith.truncf %1 : vector<8x32xf32> to vector<8x32xbf16>
    %c0_2 = arith.constant 0 : index
    %c0_3 = arith.constant 0 : index
    %3 = vector.load %arg2[%c0_2, %c0_3] : memref<32x32xbf16, #tpu.memory_space<vmem>>, vector<32x32xbf16>
    %cst = arith.constant dense<0.000000e+00> : vector<8x32xf32>
    %4 = tpu.matmul %2, %3, %cst {dimension_numbers = #tpu.dot_dimension_numbers<[1], [0], [0], [1], [0, 0, 1, 1], [], []>} : vector<8x32xbf16>, vector<32x32xbf16>, vector<8x32xf32> -> vector<8x32xf32>
    %c0_4 = arith.constant 0 : index
    %c0_5 = arith.constant 0 : index
    %5 = vector.load %arg3[%c0_4, %c0_5] : memref<1x32xf32, #tpu.memory_space<vmem>>, vector<1x32xf32>
    %6 = vector.broadcast %5 : vector<1x32xf32> to vector<8x32xf32>
    %7 = arith.addf %4, %6 : vector<8x32xf32>
    %c0_6 = arith.constant 0 : index
    %c0_7 = arith.constant 0 : index
    %8 = vector.load %arg4[%c0_6, %c0_7] : memref<32x32xbf16, #tpu.memory_space<vmem>>, vector<32x32xbf16>
    %cst_8 = arith.constant dense<0.000000e+00> : vector<8x32xf32>
    %9 = tpu.matmul %2, %8, %cst_8 {dimension_numbers = #tpu.dot_dimension_numbers<[1], [0], [0], [1], [0, 0, 1, 1], [], []>} : vector<8x32xbf16>, vector<32x32xbf16>, vector<8x32xf32> -> vector<8x32xf32>
    %c0_9 = arith.constant 0 : index
    %c0_10 = arith.constant 0 : index
    %10 = vector.load %arg5[%c0_9, %c0_10] : memref<1x32xf32, #tpu.memory_space<vmem>>, vector<1x32xf32>
    %11 = vector.broadcast %10 : vector<1x32xf32> to vector<8x32xf32>
    %12 = arith.addf %9, %11 : vector<8x32xf32>
    %13 = arith.truncf %7 : vector<8x32xf32> to vector<8x32xbf16>
    %c0_11 = arith.constant 0 : index
    %c0_12 = arith.constant 0 : index
    %c0_13 = arith.constant 0 : index
    %14 = vector.load %arg6[%c0_11, %c0_12, %c0_13] : memref<1x8x32xbf16, #tpu.memory_space<vmem>>, vector<1x8x32xbf16>
    %15 = vector.shape_cast %14 : vector<1x8x32xbf16> to vector<8x32xbf16>
    %16 = vector.shape_cast %13 : vector<8x32xbf16> to vector<1x8x32xbf16>
    tpu.vector_store %arg6[%c0_11, %c0_12, %c0_13], %16 {strides = array<i32>} : memref<1x8x32xbf16, #tpu.memory_space<vmem>>, vector<1x8x32xbf16>,
    %17 = arith.truncf %12 : vector<8x32xf32> to vector<8x32xbf16>
    %c0_14 = arith.constant 0 : index
    %c0_15 = arith.constant 0 : index
    %c0_16 = arith.constant 0 : index
    %18 = vector.load %arg7[%c0_14, %c0_15, %c0_16] : memref<1x8x32xbf16, #tpu.memory_space<vmem>>, vector<1x8x32xbf16>
    %19 = vector.shape_cast %18 : vector<1x8x32xbf16> to vector<8x32xbf16>
    %20 = vector.shape_cast %17 : vector<8x32xbf16> to vector<1x8x32xbf16>
    tpu.vector_store %arg7[%c0_14, %c0_15, %c0_16], %20 {strides = array<i32>} : memref<1x8x32xbf16, #tpu.memory_space<vmem>>, vector<1x8x32xbf16>,
    return
  }
  func.func @transform_0(%arg0: i32) -> (i32, i32, i32) {
    %c0_i32 = arith.constant 0 : i32
    %c0_i32_0 = arith.constant 0 : i32
    %c0_i32_1 = arith.constant 0 : i32
    return %arg0, %c0_i32, %c0_i32_0 : i32, i32, i32
  }
  func.func @transform_1(%arg0: i32) -> (i32, i32) {
    %c0_i32 = arith.constant 0 : i32
    %c0_i32_0 = arith.constant 0 : i32
    %c0_i32_1 = arith.constant 0 : i32
    return %c0_i32, %c0_i32_0 : i32, i32
  }
  func.func @transform_2(%arg0: i32) -> (i32, i32) {
    %c0_i32 = arith.constant 0 : i32
    %c0_i32_0 = arith.constant 0 : i32
    %c0_i32_1 = arith.constant 0 : i32
    return %c0_i32, %c0_i32_0 : i32, i32
  }
  func.func @transform_3(%arg0: i32) -> (i32, i32) {
    %c0_i32 = arith.constant 0 : i32
    %c0_i32_0 = arith.constant 0 : i32
    %c0_i32_1 = arith.constant 0 : i32
    return %c0_i32, %c0_i32_0 : i32, i32
  }
  func.func @transform_4(%arg0: i32) -> (i32, i32) {
    %c0_i32 = arith.constant 0 : i32
    %c0_i32_0 = arith.constant 0 : i32
    %c0_i32_1 = arith.constant 0 : i32
    return %c0_i32, %c0_i32_0 : i32, i32
  }
  func.func @transform_5(%arg0: i32) -> (i32, i32, i32) {
    %c0_i32 = arith.constant 0 : i32
    %c0_i32_0 = arith.constant 0 : i32
    %c0_i32_1 = arith.constant 0 : i32
    return %arg0, %c0_i32, %c0_i32_0 : i32, i32, i32
  }
  func.func @transform_6(%arg0: i32) -> (i32, i32, i32) {
    %c0_i32 = arith.constant 0 : i32
    %c0_i32_0 = arith.constant 0 : i32
    %c0_i32_1 = arith.constant 0 : i32
    return %arg0, %c0_i32, %c0_i32_0 : i32, i32, i32
  }
}

</mosaic_0001>

<llo_original>
// kernel: tpu_custom_call.1
$region0: #{tpu_custom_call.1}
  #allocation0 [shape = 'u32[]', space=smem, size = 0x4, offset = 0x4, fixed_abs, tag = 'smem constant byte address 0x4 - core index']
  #allocation1 [shape = 'u32[72,128]{1,0:T(1,128)}', space=vmem, size = 0x9000, scoped, tag = 'internal scratch']
  %s0 = inlined_call_operand.hbm [shape: f32[2,8,32], index: 0, kind: input, shape index: {}]
  %s1 = inlined_call_operand.hbm [shape: bf16[32,32], index: 1, kind: input, shape index: {}]
  %s2 = inlined_call_operand.vmem [shape: f32[1,32], index: 2, kind: input, shape index: {}]
  %s3 = inlined_call_operand.hbm [shape: bf16[32,32], index: 3, kind: input, shape index: {}]
  %s4 = inlined_call_operand.vmem [shape: f32[1,32], index: 4, kind: input, shape index: {}]
  %s5 = inlined_call_operand.hbm [shape: bf16[2,8,32], index: 5, kind: output, shape index: {0}]
  %s6 = inlined_call_operand.hbm [shape: bf16[2,8,32], index: 6, kind: output, shape index: {1}]
  %7 = xla_tuple %s5, %s6
  %s8 = sld [smem:[#allocation0]]
  $region73: #{tpu_custom_call.1} parent=0
    _
  %s10 = ssub.s32 1, %s8
  %s11 = scalar_select 0, %s10, %s8
  $region1: #{tpu_custom_call.1} parent=0
    #allocation2 [shape = 'u8[8192]{0}', space=vmem, size = 0x2000, scoped, tag = 'input window, operand 0']
    #allocation3 [shape = 's32[2]{0}', space=sflag, size = 0x8, scoped, tag = 'scoped memory for tpu_custom_call.1']
    #allocation4 [shape = 's32[2]{0}', space=sflag, size = 0x8, scoped, tag = 'scoped memory for tpu_custom_call.1']
    #allocation5 [shape = 'u8[8192]{0}', space=vmem, size = 0x2000, scoped, tag = 'input window, operand 1, single buffered']
    #allocation6 [shape = 's32[1]{0}', space=sflag, size = 0x4, scoped, tag = 'scoped memory for tpu_custom_call.1']
    #allocation7 [shape = 'u8[8192]{0}', space=vmem, size = 0x2000, scoped, tag = 'input window, operand 3, single buffered']
    #allocation8 [shape = 'u8[4096]{0}', space=vmem, size = 0x1000, scoped, tag = 'output window, operand 0']
    #allocation9 [shape = 'u8[4096]{0}', space=vmem, size = 0x1000, scoped, tag = 'output window, operand 1']
    #allocation10 [shape = 's32[2]{0}', space=sflag, size = 0x8, scoped, tag = 'scoped memory for tpu_custom_call.1']
    %12 = vsyncpa [#allocation3], 0
    %s13 = scalar_lea.sflag [#allocation3], 1
    %14 = vsyncpa %s13, 0
    %15 = vsyncpa [#allocation6], 0
    %16 = vsyncpa [#allocation4], 0
    %s17 = scalar_lea.sflag [#allocation4], 1
    %18 = vsyncpa %s17, 0
    %19 = vsyncpa [#allocation10], 0
    %s20 = scalar_lea.sflag [#allocation10], 1
    %21 = vsyncpa %s20, 0
    loop: start=0, step=1, limit=4
    $region2: #{tpu_custom_call.1} parent=1 // loop_pre_header
      _
    $region3: #{tpu_custom_call.1} parent=1 // loop_header
      %s23 = sphi 0, %s27
      %p24 = scmp.ge.s32.totalorder %s23, 4
      %s33 = sphi 0, %s35
      %s36 = sphi 0, %s33
      %s37 = sphi 0, %s36
      %s53 = sphi 0, %s37
      %s57 = sphi 0, %s57
      %s59 = sphi 0, %s57
      %s60 = sphi 0, %s59
      %s74 = sphi 0, %s60
      %s78 = sphi 0, %s78
      %s80 = sphi 0, %s78
      %s81 = sphi 0, %s80
      %s95 = sphi 0, %s81
      %s99 = sphi 0, %s99
      %s101 = sphi 0, %s99
      %s102 = sphi 0, %s101
      %s116 = sphi 0, %s102
      %s120 = sphi 0, %s120
      %s122 = sphi 0, %s120
      %s123 = sphi 0, %s122
      %s137 = sphi 0, %s123
      %s143 = sphi 0, %s145
      %s146 = sphi 0, %s143
      %s147 = sphi 0, %s146
      %s163 = sphi 0, %s147
      %s169 = sphi 0, %s171
      %s172 = sphi 0, %s169
      %s173 = sphi 0, %s172
      %s189 = sphi 0, %s173
    $region4: #{tpu_custom_call.1} parent=1 // loop_header_branch
      %26 = sbr.rel (%p24) target = $region8
    $region5: #{tpu_custom_call.1} parent=1 // loop_body
      %s28 = ssub.s32 %s23, 1
      %s29 = ssub.s32 %s23, 2
      %s30 = sadd.s32 %s23, 1
      %s31 = ssub.s32 %s23, %s30
      %p32 = scmp.eq.s32.totalorder %s31, 0
      %s34 = sadd.s32 %s33, 1
      %s35 = scalar_select %p32, %s33, %s34
      %p38 = pneg %p32
      %p39 = scmp.eq.s32.totalorder %s23, 1
      %p40 = por %p38, %p39
      %p41 = scmp.ne.s32.totalorder %s33, %s36
      %p42 = scmp.eq.s32.totalorder %s23, 0
      %p43 = por %p41, %p42
      %p44 = scmp.ne.s32.totalorder %s33, %s36
      %p45 = scmp.eq.s32.totalorder %s28, 1
      %p46 = por %p44, %p45
      %p47 = scmp.ne.s32.totalorder %s36, %s37
      %p48 = scmp.eq.s32.totalorder %s28, 0
      %p49 = por %p47, %p48
      %p50 = scmp.ne.s32.totalorder %s36, %s37
      %p51 = scmp.eq.s32.totalorder %s29, 1
      %p52 = por %p50, %p51
      %p54 = scmp.ne.s32.totalorder %s37, %s53
      %p55 = scmp.eq.s32.totalorder %s29, 0
      %p56 = por %p54, %p55
      %s58 = sadd.s32 %s57, 1
      %p61 = scmp.eq.s32.totalorder %s23, 1
      %p62 = scmp.ne.s32.totalorder %s57, %s59
      %p63 = scmp.eq.s32.totalorder %s23, 0
      %p64 = por %p62, %p63
      %p65 = scmp.ne.s32.totalorder %s57, %s59
      %p66 = scmp.eq.s32.totalorder %s28, 1
      %p67 = por %p65, %p66
      %p68 = scmp.ne.s32.totalorder %s59, %s60
      %p69 = scmp.eq.s32.totalorder %s28, 0
      %p70 = por %p68, %p69
      %p71 = scmp.ne.s32.totalorder %s59, %s60
      %p72 = scmp.eq.s32.totalorder %s29, 1
      %p73 = por %p71, %p72
      %p75 = scmp.ne.s32.totalorder %s60, %s74
      %p76 = scmp.eq.s32.totalorder %s29, 0
      %p77 = por %p75, %p76
      %s79 = sadd.s32 %s78, 1
      %p82 = scmp.eq.s32.totalorder %s23, 1
      %p83 = scmp.ne.s32.totalorder %s78, %s80
      %p84 = scmp.eq.s32.totalorder %s23, 0
      %p85 = por %p83, %p84
      %p86 = scmp.ne.s32.totalorder %s78, %s80
      %p87 = scmp.eq.s32.totalorder %s28, 1
      %p88 = por %p86, %p87
      %p89 = scmp.ne.s32.totalorder %s80, %s81
      %p90 = scmp.eq.s32.totalorder %s28, 0
      %p91 = por %p89, %p90
      %p92 = scmp.ne.s32.totalorder %s80, %s81
      %p93 = scmp.eq.s32.totalorder %s29, 1
      %p94 = por %p92, %p93
      %p96 = scmp.ne.s32.totalorder %s81, %s95
      %p97 = scmp.eq.s32.totalorder %s29, 0
      %p98 = por %p96, %p97
      %s100 = sadd.s32 %s99, 1
      %p103 = scmp.eq.s32.totalorder %s23, 1
      %p104 = scmp.ne.s32.totalorder %s99, %s101
      %p105 = scmp.eq.s32.totalorder %s23, 0
      %p106 = por %p104, %p105
      %p107 = scmp.ne.s32.totalorder %s99, %s101
      %p108 = scmp.eq.s32.totalorder %s28, 1
      %p109 = por %p107, %p108
      %p110 = scmp.ne.s32.totalorder %s101, %s102
      %p111 = scmp.eq.s32.totalorder %s28, 0
      %p112 = por %p110, %p111
      %p113 = scmp.ne.s32.totalorder %s101, %s102
      %p114 = scmp.eq.s32.totalorder %s29, 1
      %p115 = por %p113, %p114
      %p117 = scmp.ne.s32.totalorder %s102, %s116
      %p118 = scmp.eq.s32.totalorder %s29, 0
      %p119 = por %p117, %p118
      %s121 = sadd.s32 %s120, 1
      %p124 = scmp.eq.s32.totalorder %s23, 1
      %p125 = scmp.ne.s32.totalorder %s120, %s122
      %p126 = scmp.eq.s32.totalorder %s23, 0
      %p127 = por %p125, %p126
      %p128 = scmp.ne.s32.totalorder %s120, %s122
      %p129 = scmp.eq.s32.totalorder %s28, 1
      %p130 = por %p128, %p129
      %p131 = scmp.ne.s32.totalorder %s122, %s123
      %p132 = scmp.eq.s32.totalorder %s28, 0
      %p133 = por %p131, %p132
      %p134 = scmp.ne.s32.totalorder %s122, %s123
      %p135 = scmp.eq.s32.totalorder %s29, 1
      %p136 = por %p134, %p135
      %p138 = scmp.ne.s32.totalorder %s123, %s137
      %p139 = scmp.eq.s32.totalorder %s29, 0
      %p140 = por %p138, %p139
      %s141 = ssub.s32 %s23, %s30
      %p142 = scmp.eq.s32.totalorder %s141, 0
      %s144 = sadd.s32 %s143, 1
      %s145 = scalar_select %p142, %s143, %s144
      %p148 = pneg %p142
      %p149 = scmp.eq.s32.totalorder %s23, 1
      %p150 = por %p148, %p149
      %p151 = scmp.ne.s32.totalorder %s143, %s146
      %p152 = scmp.eq.s32.totalorder %s23, 0
      %p153 = por %p151, %p152
      %p154 = scmp.ne.s32.totalorder %s143, %s146
      %p155 = scmp.eq.s32.totalorder %s28, 1
      %p156 = por %p154, %p155
      %p157 = scmp.ne.s32.totalorder %s146, %s147
      %p158 = scmp.eq.s32.totalorder %s28, 0
      %p159 = por %p157, %p158
      %p160 = scmp.ne.s32.totalorder %s146, %s147
      %p161 = scmp.eq.s32.totalorder %s29, 1
      %p162 = por %p160, %p161
      %p164 = scmp.ne.s32.totalorder %s147, %s163
      %p165 = scmp.eq.s32.totalorder %s29, 0
      %p166 = por %p164, %p165
      %s167 = ssub.s32 %s23, %s30
      %p168 = scmp.eq.s32.totalorder %s167, 0
      %s170 = sadd.s32 %s169, 1
      %s171 = scalar_select %p168, %s169, %s170
      %p174 = pneg %p168
      %p175 = scmp.eq.s32.totalorder %s23, 1
      %p176 = por %p174, %p175
      %p177 = scmp.ne.s32.totalorder %s169, %s172
      %p178 = scmp.eq.s32.totalorder %s23, 0
      %p179 = por %p177, %p178
      %p180 = scmp.ne.s32.totalorder %s169, %s172
      %p181 = scmp.eq.s32.totalorder %s28, 1
      %p182 = por %p180, %p181
      %p183 = scmp.ne.s32.totalorder %s172, %s173
      %p184 = scmp.eq.s32.totalorder %s28, 0
      %p185 = por %p183, %p184
      %p186 = scmp.ne.s32.totalorder %s172, %s173
      %p187 = scmp.eq.s32.totalorder %s29, 1
      %p188 = por %p186, %p187
      %p190 = scmp.ne.s32.totalorder %s173, %s189
      %p191 = scmp.eq.s32.totalorder %s29, 0
      %p192 = por %p190, %p191
      %p193 = scmp.le.s32.totalorder 1, %s23
      %p194 = scmp.lt.s32.totalorder %s23, 3
      %p195 = pnand %p193, %p194
      %p196 = pneg %p195
      // Predicated region
      $region9: #{tpu_custom_call.1} parent=5 // pred_check
        _
      $region10: #{tpu_custom_call.1} parent=5 // pred_check_branch
        %198 = sbr.rel (%p195) target = $region12
      $region11: #{tpu_custom_call.1} parent=5 // pred_region
        %s199 = ssub.s32 %s23, 1
        // Predicated region
        $region13: #{tpu_custom_call.1} parent=11 // pred_check
          %p200 = pneg %p70
        $region14: #{tpu_custom_call.1} parent=11 // pred_check_branch
          %202 = sbr.rel (%p200) target = $region16
        $region15: #{tpu_custom_call.1} parent=11 // pred_region
          %204 = vsyncadd [#allocation6], 0
          %s205 = sshll.u32 %s1, 4
          %s206 = int_to_ptr.hbm [resolvable:$true] %s205
          %s207 = sshll.u32 [#allocation5], 4
          %s208 = int_to_ptr.vmem [resolvable:$true] %s207
          %213 = dma.hbm_to_vmem [thread:$0]  %s206, 256, %s208, [#allocation6], 64, 64, 4
        $region16: #{tpu_custom_call.1} parent=11 // pred_fallthru
          _
        // Predicated region
        $region17: #{tpu_custom_call.1} parent=11 // pred_check
          %p214 = pneg %p91
        $region18: #{tpu_custom_call.1} parent=11 // pred_check_branch
          %216 = sbr.rel (%p214) target = $region20
        $region19: #{tpu_custom_call.1} parent=11 // pred_region
          _
        $region20: #{tpu_custom_call.1} parent=11 // pred_fallthru
          _
        // Predicated region
        $region21: #{tpu_custom_call.1} parent=11 // pred_check
          %p217 = pneg %p112
        $region22: #{tpu_custom_call.1} parent=11 // pred_check_branch
          %219 = sbr.rel (%p217) target = $region24
        $region23: #{tpu_custom_call.1} parent=11 // pred_region
          %221 = vsyncadd [#allocation6], 0
          %s222 = sshll.u32 %s3, 4
          %s223 = int_to_ptr.hbm [resolvable:$true] %s222
          %s224 = sshll.u32 [#allocation7], 4
          %s225 = int_to_ptr.vmem [resolvable:$true] %s224
          %230 = dma.hbm_to_vmem [thread:$0]  %s223, 256, %s225, [#allocation6], 64, 64, 4
        $region24: #{tpu_custom_call.1} parent=11 // pred_fallthru
          _
        // Predicated region
        $region25: #{tpu_custom_call.1} parent=11 // pred_check
          %p231 = pneg %p133
        $region26: #{tpu_custom_call.1} parent=11 // pred_check_branch
          %233 = sbr.rel (%p231) target = $region28
        $region27: #{tpu_custom_call.1} parent=11 // pred_region
          _
        $region28: #{tpu_custom_call.1} parent=11 // pred_fallthru
          _
      $region12: #{tpu_custom_call.1} parent=5 // pred_fallthru
        _
      %p234 = scmp.lt.s32.totalorder %s23, 2
      // Predicated region
      $region29: #{tpu_custom_call.1} parent=5 // pred_check
        %p235 = pneg %p234
      $region30: #{tpu_custom_call.1} parent=5 // pred_check_branch
        %237 = sbr.rel (%p235) target = $region32
      $region31: #{tpu_custom_call.1} parent=5 // pred_region
        // Predicated region
        $region33: #{tpu_custom_call.1} parent=31 // pred_check
          %p238 = pneg %p43
        $region34: #{tpu_custom_call.1} parent=31 // pred_check_branch
          %240 = sbr.rel (%p238) target = $region36
        $region35: #{tpu_custom_call.1} parent=31 // pred_region
          %s241 = sand.u32 %s33, 1
          %s242 = scalar_lea.sflag [#allocation3], %s241
          %s243 = sand.u32 %s33, 1
          %s244 = smul.addr %s243, 8
          %s245 = scalar_lea.vmem [#allocation2], %s244
          %247 = vsyncadd %s242, 0
          %s248 = smul.addr %s23, 8
          %s249 = scalar_lea.hbm %s0, %s248
          %s251 = sshll.u32 %s249, 4
          %s252 = int_to_ptr.hbm [resolvable:$true] %s251
          %s253 = sshll.u32 %s245, 4
          %s254 = int_to_ptr.vmem [resolvable:$true] %s253
          %256 = dma.hbm_to_vmem [thread:$0]  %s252, 128, %s254, %s242
        $region36: #{tpu_custom_call.1} parent=31 // pred_fallthru
          _
      $region32: #{tpu_custom_call.1} parent=5 // pred_fallthru
        _
      %p257 = scmp.le.s32.totalorder 1, %s23
      %p258 = scmp.lt.s32.totalorder %s23, 3
      %p259 = pnand %p257, %p258
      %p260 = pneg %p259
      // Predicated region
      $region37: #{tpu_custom_call.1} parent=5 // pred_check
        _
      $region38: #{tpu_custom_call.1} parent=5 // pred_check_branch
        %262 = sbr.rel (%p259) target = $region40
      $region39: #{tpu_custom_call.1} parent=5 // pred_region
        %s263 = ssub.s32 %s23, 1
        %s264 = sand.u32 %s36, 1
        %s265 = scalar_lea.sflag [#allocation3], %s264
        %s266 = sand.u32 %s36, 1
        %s267 = smul.addr %s266, 8
        %s268 = scalar_lea.vmem [#allocation2], %s267
        // Predicated region
        $region41: #{tpu_custom_call.1} parent=39 // pred_check
          %p269 = pneg %p49
        $region42: #{tpu_custom_call.1} parent=39 // pred_check_branch
          %271 = sbr.rel (%p269) target = $region44
        $region43: #{tpu_custom_call.1} parent=39 // pred_region
          %273 = dma.done %s265, 128
        $region44: #{tpu_custom_call.1} parent=39 // pred_fallthru
          _
        // Predicated region
        $region45: #{tpu_custom_call.1} parent=39 // pred_check
          %p274 = pneg %p70
        $region46: #{tpu_custom_call.1} parent=39 // pred_check_branch
          %276 = sbr.rel (%p274) target = $region48
        $region47: #{tpu_custom_call.1} parent=39 // pred_region
          %278 = dma.done [#allocation6], 256
        $region48: #{tpu_custom_call.1} parent=39 // pred_fallthru
          _
        // Predicated region
        $region49: #{tpu_custom_call.1} parent=39 // pred_check
          %p279 = pneg %p112
        $region50: #{tpu_custom_call.1} parent=39 // pred_check_branch
          %281 = sbr.rel (%p279) target = $region52
        $region51: #{tpu_custom_call.1} parent=39 // pred_region
          %283 = dma.done [#allocation6], 256
        $region52: #{tpu_custom_call.1} parent=39 // pred_fallthru
          _
        %s284 = sand.u32 %s36, 1
        %s285 = scalar_lea.sflag [#allocation3], %s284
        %s286 = sand.u32 %s36, 1
        %s287 = smul.addr %s286, 8
        %s288 = scalar_lea.vmem [#allocation2], %s287
        %p289 = pneg %p49
        %p290 = pneg %p46
        %p291 = pneg %p70
        %p292 = pneg %p67
        %p293 = pneg %p91
        %p294 = pneg %p88
        %p295 = pneg %p112
        %p296 = pneg %p109
        %p297 = pneg %p133
        %p298 = pneg %p130
        %p299 = pneg %p159
        %p300 = pneg %p156
        %s301 = sand.u32 %s146, 1
        %s302 = scalar_lea.sflag [#allocation4], %s301
        %s303 = sand.u32 %s146, 1
        %s304 = smul.addr %s303, 4
        %s305 = scalar_lea.vmem [#allocation8], %s304
        %p306 = pneg %p185
        %p307 = pneg %p182
        %s308 = sand.u32 %s172, 1
        %s309 = scalar_lea.sflag [#allocation10], %s308
        %s310 = sand.u32 %s172, 1
        %s311 = smul.addr %s310, 4
        %s312 = scalar_lea.vmem [#allocation9], %s311
        %v314 = vld [vmem:[%s268] sm:$0xff]
        %v315 = vpack.c.bf16 %v314, %v314
        %v316 = vld [vmem:[#allocation5] sm:$0xf]
        %v317 = vld [vmem:[#allocation5 + $0x4] sm:$0xf]
        %v318 = vld [vmem:[#allocation5 + $0x8] sm:$0xf]
        %v319 = vld [vmem:[#allocation5 + $0xc] sm:$0xf]
        %v320 = vld [vmem:[%s2] sm:$0x1]
        %v322 = vperm.slane %v320, 0
        %v328 = vunpack.c.l.b16 %v316
        %v329 = vunpack.c.l.b16 %v317
        %v330 = vunpack.c.l.b16 %v318
        %v331 = vunpack.c.l.b16 %v319
        %v332 = vpack.c.b16 %v329, %v328
        %v333 = vpack.c.b16 %v331, %v330
        %vm336 = vcmask 261120
        %v338 = vsel %vm336, %v315, 0
        %340 = vmatpush.bf16.msra.mxu0 0
        %341 = vmatpush.bf16.msra.mxu0 0
        %342 = vmatpush.bf16.msra.mxu0 0
        %343 = vmatpush.bf16.msra.mxu0 0
        %344 = vmatpush.bf16.msra.mxu0 0
        %345 = vmatpush.bf16.msra.mxu0 0
        %346 = vmatpush.bf16.msra.mxu0 %v333
        %347 = vmatpush.bf16.msra.mxu0 %v332
        %348 = vmatmul.bf16.gmra.mxu0 %v338
        %v349 = vpop.f32.mrf.mxu0
        %v350 = vadd.f32 %v322, %v349
        %v351 = vpop.f32.mrf.mxu0
        %352 = vdwg.mxu0
        %v353 = vld [vmem:[#allocation7] sm:$0xf]
        %v354 = vld [vmem:[#allocation7 + $0x4] sm:$0xf]
        %v355 = vld [vmem:[#allocation7 + $0x8] sm:$0xf]
        %v356 = vld [vmem:[#allocation7 + $0xc] sm:$0xf]
        %v357 = vld [vmem:[%s4] sm:$0x1]
        %v359 = vperm.slane %v357, 0
        %v365 = vunpack.c.l.b16 %v353
        %v366 = vunpack.c.l.b16 %v354
        %v367 = vunpack.c.l.b16 %v355
        %v368 = vunpack.c.l.b16 %v356
        %v369 = vpack.c.b16 %v366, %v365
        %v370 = vpack.c.b16 %v368, %v367
        %373 = vmatpush.bf16.msra.mxu0 0
        %374 = vmatpush.bf16.msra.mxu0 0
        %375 = vmatpush.bf16.msra.mxu0 0
        %376 = vmatpush.bf16.msra.mxu0 0
        %377 = vmatpush.bf16.msra.mxu0 0
        %378 = vmatpush.bf16.msra.mxu0 0
        %379 = vmatpush.bf16.msra.mxu0 %v370
        %380 = vmatpush.bf16.msra.mxu0 %v369
        %381 = vmatmul.bf16.gmra.mxu0 %v338
        %v382 = vpop.f32.mrf.mxu0
        %v383 = vadd.f32 %v359, %v382
        %v384 = vpop.f32.mrf.mxu0
        %385 = vdwg.mxu0
        %v386 = vpack.c.bf16 %v350, %v350
        %vm387 = vcmask 257024
        %388 = vst.msk [vmem:[%s305] sm:$0xf] %vm387, %v386
        %v389 = vpack.c.bf16 %v383, %v383
        %390 = vst.msk [vmem:[%s312] sm:$0xf] %vm387, %v389
        %s391 = sand.u32 %s146, 1
        %s392 = scalar_lea.sflag [#allocation4], %s391
        %s393 = sand.u32 %s146, 1
        %s394 = smul.addr %s393, 4
        %s395 = scalar_lea.vmem [#allocation8], %s394
        %s396 = sand.u32 %s172, 1
        %s397 = scalar_lea.sflag [#allocation10], %s396
        %s398 = sand.u32 %s172, 1
        %s399 = smul.addr %s398, 4
        %s400 = scalar_lea.vmem [#allocation9], %s399
        // Predicated region
        $region53: #{tpu_custom_call.1} parent=39 // pred_check
          %p401 = pneg %p156
        $region54: #{tpu_custom_call.1} parent=39 // pred_check_branch
          %403 = sbr.rel (%p401) target = $region56
        $region55: #{tpu_custom_call.1} parent=39 // pred_region
          %405 = vsyncadd %s392, 0
          %s406 = smul.addr %s28, 4
          %s407 = scalar_lea.hbm %s5, %s406
          %s409 = sshll.u32 %s395, 4
          %s410 = int_to_ptr.vmem [resolvable:$true] %s409
          %s411 = sshll.u32 %s407, 4
          %s412 = int_to_ptr.hbm [resolvable:$true] %s411
          %414 = dma.vmem_to_hbm [thread:$0]  %s410, 64, %s412, %s392
        $region56: #{tpu_custom_call.1} parent=39 // pred_fallthru
          _
        // Predicated region
        $region57: #{tpu_custom_call.1} parent=39 // pred_check
          %p415 = pneg %p182
        $region58: #{tpu_custom_call.1} parent=39 // pred_check_branch
          %417 = sbr.rel (%p415) target = $region60
        $region59: #{tpu_custom_call.1} parent=39 // pred_region
          %419 = vsyncadd %s397, 0
          %s420 = smul.addr %s28, 4
          %s421 = scalar_lea.hbm %s6, %s420
          %s423 = sshll.u32 %s400, 4
          %s424 = int_to_ptr.vmem [resolvable:$true] %s423
          %s425 = sshll.u32 %s421, 4
          %s426 = int_to_ptr.hbm [resolvable:$true] %s425
          %428 = dma.vmem_to_hbm [thread:$0]  %s424, 64, %s426, %s397
        $region60: #{tpu_custom_call.1} parent=39 // pred_fallthru
          _
      $region40: #{tpu_custom_call.1} parent=5 // pred_fallthru
        _
      %p429 = scmp.le.s32.totalorder 2, %s23
      // Predicated region
      $region61: #{tpu_custom_call.1} parent=5 // pred_check
        %p430 = pneg %p429
      $region62: #{tpu_custom_call.1} parent=5 // pred_check_branch
        %432 = sbr.rel (%p430) target = $region64
      $region63: #{tpu_custom_call.1} parent=5 // pred_region
        %s433 = ssub.s32 %s23, 2
        // Predicated region
        $region65: #{tpu_custom_call.1} parent=63 // pred_check
          %p434 = pneg %p162
        $region66: #{tpu_custom_call.1} parent=63 // pred_check_branch
          %436 = sbr.rel (%p434) target = $region68
        $region67: #{tpu_custom_call.1} parent=63 // pred_region
          %s437 = sand.u32 %s147, 1
          %s438 = scalar_lea.sflag [#allocation4], %s437
          %s439 = sand.u32 %s147, 1
          %s440 = smul.addr %s439, 4
          %s441 = scalar_lea.vmem [#allocation8], %s440
          %443 = dma.done %s438, 64
        $region68: #{tpu_custom_call.1} parent=63 // pred_fallthru
          _
        // Predicated region
        $region69: #{tpu_custom_call.1} parent=63 // pred_check
          %p444 = pneg %p188
        $region70: #{tpu_custom_call.1} parent=63 // pred_check_branch
          %446 = sbr.rel (%p444) target = $region72
        $region71: #{tpu_custom_call.1} parent=63 // pred_region
          %s447 = sand.u32 %s173, 1
          %s448 = scalar_lea.sflag [#allocation10], %s447
          %s449 = sand.u32 %s173, 1
          %s450 = smul.addr %s449, 4
          %s451 = scalar_lea.vmem [#allocation9], %s450
          %453 = dma.done %s448, 64
        $region72: #{tpu_custom_call.1} parent=63 // pred_fallthru
          _
      $region64: #{tpu_custom_call.1} parent=5 // pred_fallthru
        _
    $region6: #{tpu_custom_call.1} parent=1 // loop_footer
      %s27 = sadd.s32 1, %s23
    $region7: #{tpu_custom_call.1} parent=1 // loop_footer_branch
      %22 = sbr.rel target = $region3
    $region8: #{tpu_custom_call.1} parent=1 // loop_exit
      _
    %454 = vsyncpa [#allocation3], 1
    %s455 = scalar_lea.sflag [#allocation3], 1
    %456 = vsyncpa %s455, 1
    %457 = vsyncpa [#allocation6], 1
    %458 = vsyncpa [#allocation4], 1
    %s459 = scalar_lea.sflag [#allocation4], 1
    %460 = vsyncpa %s459, 1
    %461 = vsyncpa [#allocation10], 1
    %s462 = scalar_lea.sflag [#allocation10], 1
    %463 = vsyncpa %s462, 1

</llo_original>
